<compile_context>
chip_gen: v5e
topology: v5e:2x2
jax: 0.10.0
libtpu: 0.0.40
codegen_flags: <defaults>
</compile_context>

<pallas_src>
import math

import jax
import jax.numpy as jnp
from jax import lax
from jax.experimental import pallas as pl
from jax.experimental.pallas import tpu as pltpu


_LANE = 128
_TARGET_TILE_BYTES = 2 * 1024 * 1024    # ~2 MiB of z (f32) per grid step


def _round_up(x, m):
    return ((x + m - 1) // m) * m


def _num_tensorcores():
    """Best-effort TensorCores-per-chip query (2 on v7x, 1 on v5e/v6e)."""
    try:
        info = pltpu.get_tpu_info()
        for name in ("num_cores", "core_count", "num_tensorcores",
                     "tensorcores_per_chip", "num_cores_per_chip"):
            v = getattr(info, name, None)
            if v:
                return int(v)
    except Exception:
        pass
    try:
        v = getattr(jax.devices()[0], "num_cores", None)
        if v:
            return int(v)
    except Exception:
        pass
    return 1


def _choose_block_b(B, dz, num_cores):
    """Pick a lane-dense batch tile (multiple of 128).

    Tile size is capped by ~_TARGET_TILE_BYTES of z per step so big batches
    take few fat grid steps.  Only dual-TC parts (v7x) force >= 2 (even,
    balanced) steps so the "parallel" grid axis can shard across both cores;
    single-TC v5e/v6e use one full-batch tile whenever it fits the byte cap.
    """
    n_lanes = _round_up(B, _LANE) // _LANE
    cap_lanes = max(1, _TARGET_TILE_BYTES // (4 * dz * _LANE))
    steps = pl.cdiv(n_lanes, cap_lanes)
    if num_cores >= 2:
        if steps == 1 and n_lanes >= 2:
            steps = 2                      # enough work to split across 2 TCs
        if steps > 1 and steps % 2:
            steps += 1                     # even step count -> balanced cores
    return pl.cdiv(n_lanes, steps) * _LANE


def _elu(x):
    # ELU(alpha=1).  Clamp before exp so the unselected branch of jnp.where
    # never overflows (f32 error vs expm1 ~1e-7 near 0, within tolerance).
    return jnp.where(x > 0.0, x, jnp.exp(jnp.minimum(x, 0.0)) - 1.0)


def _make_mlp_kernel(n_layers, final_reduce):
    """MLP kernel: batch-major z in, feature-major activations/output.

    Refs:
      z_ref : (block_b, dz)   batch-major, straight from HBM (no transpose pass)
      W_0   : (dl, dz)        torch layout
      W_l   : (out_l, in_l)   torch layout (final layer: (in_l, 1) if final_reduce)
      b_l   : (out_l, 1)
      out   : (out_dim, block_b)  feature-major -> lane-dense stores
    """

    def kernel(z_ref, *rest):
        out_ref = rest[-1]
        wb = rest[:-1]
        # First Linear: contract over dz on both operands ("NT" matmul) so the
        # result comes out feature-major (dl, block_b), batch on the lane axis.
        x = lax.dot_general(
            wb[0][...], z_ref[...], (((1,), (1,)), ((), ())),
            preferred_element_type=jnp.float32) + wb[1][...]
        x = _elu(x)
        # Remaining hidden layers: x <- ELU(W @ x + b); batch stays on lanes.
        for layer in range(1, n_layers - 1):
            w = wb[2 * layer][...]
            b = wb[2 * layer + 1][...]
            x = jnp.dot(w, x, preferred_element_type=jnp.float32) + b
            x = _elu(x)
        w = wb[2 * (n_layers - 1)][...]
        b = wb[2 * (n_layers - 1) + 1][...]
        if final_reduce:
            # out_dim == 1: VPU broadcast-multiply + sublane (XLU) reduction
            # instead of an M=1 MXU matmul.  w: (dl, 1), x: (dl, block_b).
            x = jnp.sum(x * w, axis=0, keepdims=True) + b
        else:
            x = jnp.dot(w, x, preferred_element_type=jnp.float32) + b
        out_ref[...] = jax.nn.sigmoid(x).astype(out_ref.dtype)

    return kernel


def py1_forward(z, weights, biases, *, block_b=None, interpret=False):
    """py1 forward: sigmoid(W_L(...ELU(W_0 z + b_0)...) + b_L).

    z:       (B, dz) float32
    weights: list of torch-layout (out_l, in_l) float32 arrays
    biases:  list of (out_l,) float32 arrays
    """
    B, dz = z.shape
    n_layers = len(weights)
    assert n_layers >= 2, "py1 always has >= 2 Linear layers"
    out_dim = weights[-1].shape[0]
    final_reduce = out_dim == 1

    if block_b is None:
        block_b = _choose_block_b(B, dz, _num_tensorcores())
    block_b = _round_up(block_b, _LANE)
    grid = pl.cdiv(B, block_b)

    kernel = _make_mlp_kernel(n_layers, final_reduce)

    # z is consumed batch-major; the kernel's first dot_general does the
    # layout flip, so no wrapper-side transpose/pad HBM pass is needed.
    in_specs = [pl.BlockSpec((block_b, dz), lambda i: (i, 0))]
    flat_params = []
    for li, (w, b) in enumerate(zip(weights, biases)):
        if li == n_layers - 1 and final_reduce:
            wk = w.T                      # (dl, 1): kernel uses VPU+XLU reduce
        else:
            wk = w                        # (out_l, in_l): kernel does W @ x
        bk = b.reshape(-1, 1)             # (out_l, 1): broadcasts over lanes
        in_specs.append(pl.BlockSpec(wk.shape, lambda i: (0, 0)))
        in_specs.append(pl.BlockSpec(bk.shape, lambda i: (0, 0)))
        flat_params += [wk, bk]

    out_spec = pl.BlockSpec((out_dim, block_b), lambda i: (0, i))

    # VMEM budget: double-buffered z/out blocks + resident params + live
    # activations, +25% headroom; capped at 48 MiB (headroom under v7x's
    # 64 MiB physical VMEM).
    param_bytes = 4 * sum(int(p.size) for p in flat_params)
    dl_max = max((w.shape[0] for w in weights[:-1]), default=out_dim)
    act_bytes = 4 * block_b * (dz + out_dim + 2 * dl_max)
    vmem_limit = int(min(48 * 1024 * 1024,
                         max(4 * 1024 * 1024,
                             (2 * param_bytes + 2 * act_bytes) * 5 // 4)))

    out = pl.pallas_call(
        kernel,
        out_shape=jax.ShapeDtypeStruct((out_dim, B), jnp.float32),
        grid_spec=pltpu.PrefetchScalarGridSpec(
            num_scalar_prefetch=0,
            grid=(grid,),
            in_specs=in_specs,
            out_specs=out_spec,
        ),
        compiler_params=pltpu.CompilerParams(
            dimension_semantics=("parallel",),
            vmem_limit_bytes=vmem_limit,
        ),
        interpret=interpret,
    )(z, *flat_params)

    return out.T                                           # (B, out_dim)


def init_py1_params(key, dz, out, h, dl):
    """PyTorch nn.Linear default init: U(-1/sqrt(fan_in), 1/sqrt(fan_in)).

    Weights in torch layout (out_features, in_features), biases (out_features,).
    """
    dims = [(dl, dz)] + [(dl, dl)] * h + [(out, dl)]
    weights, biases = [], []
    for fan_out, fan_in in dims:
        key, kw, kb = jax.random.split(key, 3)
        bound = 1.0 / math.sqrt(fan_in)
        weights.append(
            jax.random.uniform(kw, (fan_out, fan_in), jnp.float32, -bound, bound))
        biases.append(
            jax.random.uniform(kb, (fan_out,), jnp.float32, -bound, bound))
    return weights, biases


def py1_reference(z, weights, biases):
    """Pure-JAX reference (batch-major, torch-layout weights)."""
    x = z
    n = len(weights)
    for i, (w, b) in enumerate(zip(weights, biases)):
        x = x @ w.T + b
        if i < n - 1:
            x = jnp.where(x > 0.0, x, jnp.expm1(x))        # ELU(alpha=1)
    return jax.nn.sigmoid(x)


if __name__ == "__main__":
    key = jax.random.PRNGKey(0)

    # py1(dz, out, h, dl, actv=nn.ELU()) at small CEVAE-style sizes.
    # Covers: lane-aligned batch (B=128), partial last block (B=200), the
    # out=1 reduce head, and the out>1 matmul head.
    for (dz, out, h, dl) in ((16, 1, 2, 32), (16, 3, 1, 32)):
        key, kp = jax.random.split(key)
        weights, biases = init_py1_params(kp, dz, out, h, dl)
        for B in (128, 200):
            key, kz = jax.random.split(key)
            z = jax.random.normal(kz, (B, dz), jnp.float32)

            y = jax.block_until_ready(py1_forward(z, weights, biases))
            y_ref = py1_reference(z, weights, biases)

            assert y.shape == (B, out), (y.shape, (B, out))
            assert bool(jnp.all(jnp.isfinite(y)))
            err = float(jnp.max(jnp.abs(y - y_ref)))
            assert err < 1e-5, f"dz={dz} out={out} B={B}: mismatch {err}"

    print("KERNEL_OK")
</pallas_src>

<mosaic_0001>
module attributes {stable_mosaic.version = 11 : i64} {
  func.func @kernel(%arg0: i32, %arg1: memref<128x16xf32, #tpu.memory_space<vmem>>, %arg2: memref<32x16xf32, #tpu.memory_space<vmem>>, %arg3: memref<32x1xf32, #tpu.memory_space<vmem>>, %arg4: memref<32x32xf32, #tpu.memory_space<vmem>>, %arg5: memref<32x1xf32, #tpu.memory_space<vmem>>, %arg6: memref<32x32xf32, #tpu.memory_space<vmem>>, %arg7: memref<32x1xf32, #tpu.memory_space<vmem>>, %arg8: memref<32x1xf32, #tpu.memory_space<vmem>>, %arg9: memref<1x1xf32, #tpu.memory_space<vmem>>, %arg10: memref<1x128xf32, #tpu.memory_space<vmem>>) attributes {dimension_semantics = [#tpu.dimension_semantics<parallel>], iteration_bounds = array<i64: 1>, scalar_prefetch = 0 : i64, scratch_operands = 0 : i64, tpu.core_type = #tpu.core_type<tc>, window_params = [{transform_indices = @transform_0, window_bounds = array<i64: 128, 16>}, {pipeline_mode = #tpu.pipeline_mode<synchronous>, transform_indices = @transform_1, window_bounds = array<i64: 32, 16>}, {pipeline_mode = #tpu.pipeline_mode<synchronous>, transform_indices = @transform_2, window_bounds = array<i64: 32, 1>}, {pipeline_mode = #tpu.pipeline_mode<synchronous>, transform_indices = @transform_3, window_bounds = array<i64: 32, 32>}, {pipeline_mode = #tpu.pipeline_mode<synchronous>, transform_indices = @transform_4, window_bounds = array<i64: 32, 1>}, {pipeline_mode = #tpu.pipeline_mode<synchronous>, transform_indices = @transform_5, window_bounds = array<i64: 32, 32>}, {pipeline_mode = #tpu.pipeline_mode<synchronous>, transform_indices = @transform_6, window_bounds = array<i64: 32, 1>}, {pipeline_mode = #tpu.pipeline_mode<synchronous>, transform_indices = @transform_7, window_bounds = array<i64: 32, 1>}, {pipeline_mode = #tpu.pipeline_mode<synchronous>, transform_indices = @transform_8, window_bounds = array<i64: 1, 1>}, {transform_indices = @transform_9, window_bounds = array<i64: 1, 128>}]} {
    %c0 = arith.constant 0 : index
    %c0_0 = arith.constant 0 : index
    %0 = vector.load %arg2[%c0, %c0_0] : memref<32x16xf32, #tpu.memory_space<vmem>>, vector<32x16xf32>
    %c0_1 = arith.constant 0 : index
    %c0_2 = arith.constant 0 : index
    %1 = vector.load %arg1[%c0_1, %c0_2] : memref<128x16xf32, #tpu.memory_space<vmem>>, vector<128x16xf32>
    %cst = arith.constant dense<0.000000e+00> : vector<32x128xf32>
    %2 = tpu.matmul %0, %1, %cst {dimension_numbers = #tpu.dot_dimension_numbers<[1], [1], [0], [0], [0, 0, 1, 0], [], []>} : vector<32x16xf32>, vector<128x16xf32>, vector<32x128xf32> -> vector<32x128xf32>
    %c0_3 = arith.constant 0 : index
    %c0_4 = arith.constant 0 : index
    %3 = vector.load %arg3[%c0_3, %c0_4] : memref<32x1xf32, #tpu.memory_space<vmem>>, vector<32x1xf32>
    %4 = vector.broadcast %3 : vector<32x1xf32> to vector<32x128xf32>
    %5 = arith.addf %2, %4 : vector<32x128xf32>
    %cst_5 = arith.constant 0.000000e+00 : f32
    %6 = vector.broadcast %cst_5 : f32 to vector<32x128xf32>
    %7 = arith.cmpf ogt, %5, %6 : vector<32x128xf32>
    %cst_6 = arith.constant 0.000000e+00 : f32
    %8 = vector.broadcast %cst_6 : f32 to vector<32x128xf32>
    %9 = arith.minimumf %5, %8 : vector<32x128xf32>
    %10 = math.exp %9 : vector<32x128xf32>
    %cst_7 = arith.constant 1.000000e+00 : f32
    %11 = vector.broadcast %cst_7 : f32 to vector<32x128xf32>
    %12 = arith.subf %10, %11 : vector<32x128xf32>
    %13 = arith.select %7, %5, %12 : vector<32x128xi1>, vector<32x128xf32>
    %c0_8 = arith.constant 0 : index
    %c0_9 = arith.constant 0 : index
    %14 = vector.load %arg4[%c0_8, %c0_9] : memref<32x32xf32, #tpu.memory_space<vmem>>, vector<32x32xf32>
    %c0_10 = arith.constant 0 : index
    %c0_11 = arith.constant 0 : index
    %15 = vector.load %arg5[%c0_10, %c0_11] : memref<32x1xf32, #tpu.memory_space<vmem>>, vector<32x1xf32>
    %cst_12 = arith.constant dense<0.000000e+00> : vector<32x128xf32>
    %16 = tpu.matmul %14, %13, %cst_12 {dimension_numbers = #tpu.dot_dimension_numbers<[1], [0], [0], [1], [0, 0, 1, 1], [], []>} : vector<32x32xf32>, vector<32x128xf32>, vector<32x128xf32> -> vector<32x128xf32>
    %17 = vector.broadcast %15 : vector<32x1xf32> to vector<32x128xf32>
    %18 = arith.addf %16, %17 : vector<32x128xf32>
    %cst_13 = arith.constant 0.000000e+00 : f32
    %19 = vector.broadcast %cst_13 : f32 to vector<32x128xf32>
    %20 = arith.cmpf ogt, %18, %19 : vector<32x128xf32>
    %cst_14 = arith.constant 0.000000e+00 : f32
    %21 = vector.broadcast %cst_14 : f32 to vector<32x128xf32>
    %22 = arith.minimumf %18, %21 : vector<32x128xf32>
    %23 = math.exp %22 : vector<32x128xf32>
    %cst_15 = arith.constant 1.000000e+00 : f32
    %24 = vector.broadcast %cst_15 : f32 to vector<32x128xf32>
    %25 = arith.subf %23, %24 : vector<32x128xf32>
    %26 = arith.select %20, %18, %25 : vector<32x128xi1>, vector<32x128xf32>
    %c0_16 = arith.constant 0 : index
    %c0_17 = arith.constant 0 : index
    %27 = vector.load %arg6[%c0_16, %c0_17] : memref<32x32xf32, #tpu.memory_space<vmem>>, vector<32x32xf32>
    %c0_18 = arith.constant 0 : index
    %c0_19 = arith.constant 0 : index
    %28 = vector.load %arg7[%c0_18, %c0_19] : memref<32x1xf32, #tpu.memory_space<vmem>>, vector<32x1xf32>
    %cst_20 = arith.constant dense<0.000000e+00> : vector<32x128xf32>
    %29 = tpu.matmul %27, %26, %cst_20 {dimension_numbers = #tpu.dot_dimension_numbers<[1], [0], [0], [1], [0, 0, 1, 1], [], []>} : vector<32x32xf32>, vector<32x128xf32>, vector<32x128xf32> -> vector<32x128xf32>
    %30 = vector.broadcast %28 : vector<32x1xf32> to vector<32x128xf32>
    %31 = arith.addf %29, %30 : vector<32x128xf32>
    %cst_21 = arith.constant 0.000000e+00 : f32
    %32 = vector.broadcast %cst_21 : f32 to vector<32x128xf32>
    %33 = arith.cmpf ogt, %31, %32 : vector<32x128xf32>
    %cst_22 = arith.constant 0.000000e+00 : f32
    %34 = vector.broadcast %cst_22 : f32 to vector<32x128xf32>
    %35 = arith.minimumf %31, %34 : vector<32x128xf32>
    %36 = math.exp %35 : vector<32x128xf32>
    %cst_23 = arith.constant 1.000000e+00 : f32
    %37 = vector.broadcast %cst_23 : f32 to vector<32x128xf32>
    %38 = arith.subf %36, %37 : vector<32x128xf32>
    %39 = arith.select %33, %31, %38 : vector<32x128xi1>, vector<32x128xf32>
    %c0_24 = arith.constant 0 : index
    %c0_25 = arith.constant 0 : index
    %40 = vector.load %arg8[%c0_24, %c0_25] : memref<32x1xf32, #tpu.memory_space<vmem>>, vector<32x1xf32>
    %c0_26 = arith.constant 0 : index
    %c0_27 = arith.constant 0 : index
    %41 = vector.load %arg9[%c0_26, %c0_27] : memref<1x1xf32, #tpu.memory_space<vmem>>, vector<1x1xf32>
    %42 = vector.broadcast %40 : vector<32x1xf32> to vector<32x128xf32>
    %43 = arith.mulf %39, %42 : vector<32x128xf32>
    %cst_28 = arith.constant dense<0.000000e+00> : vector<128xf32>
    %44 = vector.multi_reduction <add>, %43, %cst_28 [0] : vector<32x128xf32> to vector<128xf32>
    %45 = vector.shape_cast %44 : vector<128xf32> to vector<1x128xf32>
    %46 = vector.broadcast %41 : vector<1x1xf32> to vector<1x128xf32>
    %47 = arith.addf %45, %46 : vector<1x128xf32>
    %48 = arith.negf %47 : vector<1x128xf32>
    %49 = math.exp %48 : vector<1x128xf32>
    %cst_29 = arith.constant 1.000000e+00 : f32
    %50 = vector.broadcast %cst_29 : f32 to vector<1x128xf32>
    %51 = arith.addf %50, %49 : vector<1x128xf32>
    %52 = arith.divf %50, %51 : vector<1x128xf32>
    %c0_30 = arith.constant 0 : index
    %c0_31 = arith.constant 0 : index
    %53 = vector.load %arg10[%c0_30, %c0_31] : memref<1x128xf32, #tpu.memory_space<vmem>>, vector<1x128xf32>
    tpu.vector_store %arg10[%c0_30, %c0_31], %52 {strides = array<i32>} : memref<1x128xf32, #tpu.memory_space<vmem>>, vector<1x128xf32>,
    return
  }
  func.func @transform_0(%arg0: i32) -> (i32, i32) {
    %c0_i32 = arith.constant 0 : i32
    %c0_i32_0 = arith.constant 0 : i32
    return %arg0, %c0_i32 : i32, i32
  }
  func.func @transform_1(%arg0: i32) -> (i32, i32) {
    %c0_i32 = arith.constant 0 : i32
    %c0_i32_0 = arith.constant 0 : i32
    %c0_i32_1 = arith.constant 0 : i32
    return %c0_i32, %c0_i32_0 : i32, i32
  }
  func.func @transform_2(%arg0: i32) -> (i32, i32) {
    %c0_i32 = arith.constant 0 : i32
    %c0_i32_0 = arith.constant 0 : i32
    %c0_i32_1 = arith.constant 0 : i32
    return %c0_i32, %c0_i32_0 : i32, i32
  }
  func.func @transform_3(%arg0: i32) -> (i32, i32) {
    %c0_i32 = arith.constant 0 : i32
    %c0_i32_0 = arith.constant 0 : i32
    %c0_i32_1 = arith.constant 0 : i32
    return %c0_i32, %c0_i32_0 : i32, i32
  }
  func.func @transform_4(%arg0: i32) -> (i32, i32) {
    %c0_i32 = arith.constant 0 : i32
    %c0_i32_0 = arith.constant 0 : i32
    %c0_i32_1 = arith.constant 0 : i32
    return %c0_i32, %c0_i32_0 : i32, i32
  }
  func.func @transform_5(%arg0: i32) -> (i32, i32) {
    %c0_i32 = arith.constant 0 : i32
    %c0_i32_0 = arith.constant 0 : i32
    %c0_i32_1 = arith.constant 0 : i32
    return %c0_i32, %c0_i32_0 : i32, i32
  }
  func.func @transform_6(%arg0: i32) -> (i32, i32) {
    %c0_i32 = arith.constant 0 : i32
    %c0_i32_0 = arith.constant 0 : i32
    %c0_i32_1 = arith.constant 0 : i32
    return %c0_i32, %c0_i32_0 : i32, i32
  }
  func.func @transform_7(%arg0: i32) -> (i32, i32) {
    %c0_i32 = arith.constant 0 : i32
    %c0_i32_0 = arith.constant 0 : i32
    %c0_i32_1 = arith.constant 0 : i32
    return %c0_i32, %c0_i32_0 : i32, i32
  }
  func.func @transform_8(%arg0: i32) -> (i32, i32) {
    %c0_i32 = arith.constant 0 : i32
    %c0_i32_0 = arith.constant 0 : i32
    %c0_i32_1 = arith.constant 0 : i32
    return %c0_i32, %c0_i32_0 : i32, i32
  }
  func.func @transform_9(%arg0: i32) -> (i32, i32) {
    %c0_i32 = arith.constant 0 : i32
    %c0_i32_0 = arith.constant 0 : i32
    return %c0_i32, %arg0 : i32, i32
  }
}

</mosaic_0001>

<llo_original>
// kernel: tpu_custom_call.1
$region0: #{tpu_custom_call.1}
  #allocation0 [shape = 'u32[]', space=smem, size = 0x4, offset = 0x4, fixed_abs, tag = 'smem constant byte address 0x4 - core index']
  #allocation1 [shape = 'u32[72,128]{1,0:T(1,128)}', space=vmem, size = 0x9000, scoped, tag = 'internal scratch']
  #allocation2 [shape = 'f32[1,1]{1,0:T(1,128)S(1)}', space=vmem, size = 0x200, scoped, tag = 'scoped memory for tpu_custom_call.1']
  %s0 = inlined_call_operand.vmem [shape: f32[128,16], index: 0, kind: input, shape index: {}]
  %s1 = inlined_call_operand.vmem [shape: f32[32,16], index: 1, kind: input, shape index: {}]
  %s2 = inlined_call_operand.vmem [shape: f32[32,1], index: 2, kind: input, shape index: {}]
  %s3 = inlined_call_operand.vmem [shape: f32[32,32], index: 3, kind: input, shape index: {}]
  %s4 = inlined_call_operand.vmem [shape: f32[32,1], index: 4, kind: input, shape index: {}]
  %s5 = inlined_call_operand.vmem [shape: f32[32,32], index: 5, kind: input, shape index: {}]
  %s6 = inlined_call_operand.vmem [shape: f32[32,1], index: 6, kind: input, shape index: {}]
  %s7 = inlined_call_operand.vmem [shape: f32[32,1], index: 7, kind: input, shape index: {}]
  %s8 = inlined_call_operand.<no memory space> [shape: f32[1,1], index: 8, kind: input, shape index: {}]
  %s9 = inlined_call_operand.hbm [shape: f32[1,128], index: 9, kind: output, shape index: {}]
  %s10 = sld [smem:[#allocation0]]
  $region46: #{tpu_custom_call.1} parent=0
    _
  %s12 = ssub.s32 1, %s10
  %s13 = scalar_select 0, %s12, %s10
  %v14 = vstv %s8
  %15 = vst [vmem:[#allocation2] sm:$0x1] %v14
  $region1: #{tpu_custom_call.1} parent=0
    #allocation3 [shape = 'u8[512]{0}', space=vmem, size = 0x400, scoped, tag = 'output window, operand 0, single buffered']
    #allocation4 [shape = 's32[1]{0}', space=sflag, size = 0x4, scoped, tag = 'scoped memory for tpu_custom_call.1']
    %16 = vsyncpa [#allocation4], 0
    // Predicated region
    $region2: #{tpu_custom_call.1} parent=1 // pred_check
      _
    $region3: #{tpu_custom_call.1} parent=1 // pred_check_branch
      %18 = sbr.rel (0) target = $region5
    $region4: #{tpu_custom_call.1} parent=1 // pred_region
      _
    $region5: #{tpu_custom_call.1} parent=1 // pred_fallthru
      _
    // Predicated region
    $region6: #{tpu_custom_call.1} parent=1 // pred_check
      _
    $region7: #{tpu_custom_call.1} parent=1 // pred_check_branch
      %20 = sbr.rel (0) target = $region9
    $region8: #{tpu_custom_call.1} parent=1 // pred_region
      _
    $region9: #{tpu_custom_call.1} parent=1 // pred_fallthru
      _
    // Predicated region
    $region10: #{tpu_custom_call.1} parent=1 // pred_check
      _
    $region11: #{tpu_custom_call.1} parent=1 // pred_check_branch
      %22 = sbr.rel (0) target = $region13
    $region12: #{tpu_custom_call.1} parent=1 // pred_region
      _
    $region13: #{tpu_custom_call.1} parent=1 // pred_fallthru
      _
    // Predicated region
    $region14: #{tpu_custom_call.1} parent=1 // pred_check
      _
    $region15: #{tpu_custom_call.1} parent=1 // pred_check_branch
      %24 = sbr.rel (0) target = $region17
    $region16: #{tpu_custom_call.1} parent=1 // pred_region
      _
    $region17: #{tpu_custom_call.1} parent=1 // pred_fallthru
      _
    // Predicated region
    $region18: #{tpu_custom_call.1} parent=1 // pred_check
      _
    $region19: #{tpu_custom_call.1} parent=1 // pred_check_branch
      %26 = sbr.rel (0) target = $region21
    $region20: #{tpu_custom_call.1} parent=1 // pred_region
      _
    $region21: #{tpu_custom_call.1} parent=1 // pred_fallthru
      _
    // Predicated region
    $region22: #{tpu_custom_call.1} parent=1 // pred_check
      _
    $region23: #{tpu_custom_call.1} parent=1 // pred_check_branch
      %28 = sbr.rel (0) target = $region25
    $region24: #{tpu_custom_call.1} parent=1 // pred_region
      _
    $region25: #{tpu_custom_call.1} parent=1 // pred_fallthru
      _
    // Predicated region
    $region26: #{tpu_custom_call.1} parent=1 // pred_check
      _
    $region27: #{tpu_custom_call.1} parent=1 // pred_check_branch
      %30 = sbr.rel (0) target = $region29
    $region28: #{tpu_custom_call.1} parent=1 // pred_region
      _
    $region29: #{tpu_custom_call.1} parent=1 // pred_fallthru
      _
    // Predicated region
    $region30: #{tpu_custom_call.1} parent=1 // pred_check
      _
    $region31: #{tpu_custom_call.1} parent=1 // pred_check_branch
      %32 = sbr.rel (0) target = $region33
    $region32: #{tpu_custom_call.1} parent=1 // pred_region
      _
    $region33: #{tpu_custom_call.1} parent=1 // pred_fallthru
      _
    // Predicated region
    $region34: #{tpu_custom_call.1} parent=1 // pred_check
      _
    $region35: #{tpu_custom_call.1} parent=1 // pred_check_branch
      %34 = sbr.rel (0) target = $region37
    $region36: #{tpu_custom_call.1} parent=1 // pred_region
      _
    $region37: #{tpu_custom_call.1} parent=1 // pred_fallthru
      _
    %v35 = vld [vmem:[%s1] sm:$0xff]
    %v36 = vld [vmem:[%s1 + $0x8] sm:$0xff]
    %v37 = vld [vmem:[%s1 + $0x10] sm:$0xff]
    %v38 = vld [vmem:[%s1 + $0x18] sm:$0xff]
    %v39 = vld [vmem:[%s0] sm:$0xff]
    %v40 = vld [vmem:[%s0 + $0x8] sm:$0xff]
    %v41 = vld [vmem:[%s0 + $0x10] sm:$0xff]
    %v42 = vld [vmem:[%s0 + $0x18] sm:$0xff]
    %v43 = vld [vmem:[%s0 + $0x20] sm:$0xff]
    %v44 = vld [vmem:[%s0 + $0x28] sm:$0xff]
    %v45 = vld [vmem:[%s0 + $0x30] sm:$0xff]
    %v46 = vld [vmem:[%s0 + $0x38] sm:$0xff]
    %v47 = vld [vmem:[%s0 + $0x40] sm:$0xff]
    %v48 = vld [vmem:[%s0 + $0x48] sm:$0xff]
    %v49 = vld [vmem:[%s0 + $0x50] sm:$0xff]
    %v50 = vld [vmem:[%s0 + $0x58] sm:$0xff]
    %v51 = vld [vmem:[%s0 + $0x60] sm:$0xff]
    %v52 = vld [vmem:[%s0 + $0x68] sm:$0xff]
    %v53 = vld [vmem:[%s0 + $0x70] sm:$0xff]
    %v54 = vld [vmem:[%s0 + $0x78] sm:$0xff]
    %v55 = vld [vmem:[%s2] sm:$0xff]
    %v56 = vld [vmem:[%s2 + $0x8] sm:$0xff]
    %v57 = vld [vmem:[%s2 + $0x10] sm:$0xff]
    %v58 = vld [vmem:[%s2 + $0x18] sm:$0xff]
    %60 = vset.pattern.permute.xlu0 0
    %61 = vperm.xlu0 %60, %v55
    %v62 = vpop.permute.xlu0 %61
    %65 = vset.pattern.permute.xlu0 0
    %66 = vperm.xlu0 %65, %v56
    %v67 = vpop.permute.xlu0 %66
    %70 = vset.pattern.permute.xlu0 0
    %71 = vperm.xlu0 %70, %v57
    %v72 = vpop.permute.xlu0 %71
    %75 = vset.pattern.permute.xlu0 0
    %76 = vperm.xlu0 %75, %v58
    %v77 = vpop.permute.xlu0 %76
    %vm79 = vcmask 130048
    %v81 = vsel %vm79, %v35, 0
    %v84 = vsel %vm79, %v36, 0
    %v87 = vsel %vm79, %v37, 0
    %v90 = vsel %vm79, %v38, 0
    %v93 = vsel %vm79, %v39, 0
    %v96 = vsel %vm79, %v40, 0
    %v99 = vsel %vm79, %v41, 0
    %v102 = vsel %vm79, %v42, 0
    %v105 = vsel %vm79, %v43, 0
    %v108 = vsel %vm79, %v44, 0
    %v111 = vsel %vm79, %v45, 0
    %v114 = vsel %vm79, %v46, 0
    %v117 = vsel %vm79, %v47, 0
    %v120 = vsel %vm79, %v48, 0
    %v123 = vsel %vm79, %v49, 0
    %v126 = vsel %vm79, %v50, 0
    %v129 = vsel %vm79, %v51, 0
    %v132 = vsel %vm79, %v52, 0
    %v135 = vsel %vm79, %v53, 0
    %v138 = vsel %vm79, %v54, 0
    %140 = vmatpush.xpose.msra.mxu0 %v138
    %141 = vmatpush.xpose.msra.mxu0 %v135
    %142 = vmatpush.xpose.msra.mxu0 %v132
    %143 = vmatpush.xpose.msra.mxu0 %v129
    %144 = vmatpush.xpose.msra.mxu0 %v126
    %145 = vmatpush.xpose.msra.mxu0 %v123
    %146 = vmatpush.xpose.msra.mxu0 %v120
    %147 = vmatpush.xpose.msra.mxu0 %v117
    %148 = vmatpush.xpose.msra.mxu0 %v114
    %149 = vmatpush.xpose.msra.mxu0 %v111
    %150 = vmatpush.xpose.msra.mxu0 %v108
    %151 = vmatpush.xpose.msra.mxu0 %v105
    %152 = vmatpush.xpose.msra.mxu0 %v102
    %153 = vmatpush.xpose.msra.mxu0 %v99
    %154 = vmatpush.xpose.msra.mxu0 %v96
    %155 = vmatpush.xpose.msra.mxu0 %v93
    %156 = vmatmul.f32.gmra.mxu0 %v81
    %v157 = vpop.f32.mrf.mxu0
    %v158 = vadd.f32 %v62, %v157
    %159 = vmatmul.f32.gmra.mxu0 %v84
    %v160 = vpop.f32.mrf.mxu0
    %v161 = vadd.f32 %v67, %v160
    %162 = vmatmul.f32.gmra.mxu0 %v87
    %v163 = vpop.f32.mrf.mxu0
    %v164 = vadd.f32 %v72, %v163
    %165 = vmatmul.f32.gmra.mxu0 %v90
    %v166 = vpop.f32.mrf.mxu0
    %v167 = vadd.f32 %v77, %v166
    %168 = vdwg.mxu0
    %vm169 = vcmp.gt.f32.partialorder %v158, 0.0
    %vm170 = vcmp.gt.f32.partialorder %v161, 0.0
    %vm171 = vcmp.gt.f32.partialorder %v164, 0.0
    %vm172 = vcmp.gt.f32.partialorder %v167, 0.0
    %v173 = vmin.f32 %v158, 0.0
    %v174 = vmin.f32 %v161, 0.0
    %v175 = vmin.f32 %v164, 0.0
    %v176 = vmin.f32 %v167, 0.0
    %v177 = vmul.f32 %v173, 1.442695
    %v178 = vpow.pop %v177
    %v179 = vmul.f32 %v174, 1.442695
    %v180 = vpow.pop %v179
    %v181 = vmul.f32 %v175, 1.442695
    %v182 = vpow.pop %v181
    %v183 = vmul.f32 %v176, 1.442695
    %v184 = vpow.pop %v183
    %v185 = vsub.f32 %v178, 1.0
    %v186 = vsub.f32 %v180, 1.0
    %v187 = vsub.f32 %v182, 1.0
    %v188 = vsub.f32 %v184, 1.0
    %v189 = vsel %vm169, %v158, %v185
    %v190 = vsel %vm170, %v161, %v186
    %v191 = vsel %vm171, %v164, %v187
    %v192 = vsel %vm172, %v167, %v188
    %v193 = vld [vmem:[%s3] sm:$0xff]
    %v194 = vld [vmem:[%s3 + $0x8] sm:$0xff]
    %v195 = vld [vmem:[%s3 + $0x10] sm:$0xff]
    %v196 = vld [vmem:[%s3 + $0x18] sm:$0xff]
    %v197 = vld [vmem:[%s4] sm:$0xff]
    %v198 = vld [vmem:[%s4 + $0x8] sm:$0xff]
    %v199 = vld [vmem:[%s4 + $0x10] sm:$0xff]
    %v200 = vld [vmem:[%s4 + $0x18] sm:$0xff]
    %202 = vset.pattern.permute.xlu0 0
    %203 = vperm.xlu0 %202, %v197
    %v204 = vpop.permute.xlu0 %203
    %207 = vset.pattern.permute.xlu0 0
    %208 = vperm.xlu0 %207, %v198
    %v209 = vpop.permute.xlu0 %208
    %212 = vset.pattern.permute.xlu0 0
    %213 = vperm.xlu0 %212, %v199
    %v214 = vpop.permute.xlu0 %213
    %217 = vset.pattern.permute.xlu0 0
    %218 = vperm.xlu0 %217, %v200
    %v219 = vpop.permute.xlu0 %218
    %vm221 = vcmask 261120
    %v223 = vsel %vm221, %v193, 0
    %v226 = vsel %vm221, %v194, 0
    %v229 = vsel %vm221, %v195, 0
    %v232 = vsel %vm221, %v196, 0
    %234 = vmatpush.msra.mxu0 0.0
    %235 = vmatpush.msra.mxu0 0.0
    %236 = vmatpush.msra.mxu0 0.0
    %237 = vmatpush.msra.mxu0 0.0
    %238 = vmatpush.msra.mxu0 0.0
    %239 = vmatpush.msra.mxu0 0.0
    %240 = vmatpush.msra.mxu0 0.0
    %241 = vmatpush.msra.mxu0 0.0
    %242 = vmatpush.msra.mxu0 0.0
    %243 = vmatpush.msra.mxu0 0.0
    %244 = vmatpush.msra.mxu0 0.0
    %245 = vmatpush.msra.mxu0 0.0
    %246 = vmatpush.msra.mxu0 %v192
    %247 = vmatpush.msra.mxu0 %v191
    %248 = vmatpush.msra.mxu0 %v190
    %249 = vmatpush.msra.mxu0 %v189
    %250 = vmatmul.f32.gmra.mxu0 %v223
    %v251 = vpop.f32.mrf.mxu0
    %v252 = vadd.f32 %v204, %v251
    %253 = vmatmul.f32.gmra.mxu0 %v226
    %v254 = vpop.f32.mrf.mxu0
    %v255 = vadd.f32 %v209, %v254
    %256 = vmatmul.f32.gmra.mxu0 %v229
    %v257 = vpop.f32.mrf.mxu0
    %v258 = vadd.f32 %v214, %v257
    %259 = vmatmul.f32.gmra.mxu0 %v232
    %v260 = vpop.f32.mrf.mxu0
    %v261 = vadd.f32 %v219, %v260
    %262 = vdwg.mxu0
    %vm263 = vcmp.gt.f32.partialorder %v252, 0.0
    %vm264 = vcmp.gt.f32.partialorder %v255, 0.0
    %vm265 = vcmp.gt.f32.partialorder %v258, 0.0
    %vm266 = vcmp.gt.f32.partialorder %v261, 0.0
    %v267 = vmin.f32 %v252, 0.0
    %v268 = vmin.f32 %v255, 0.0
    %v269 = vmin.f32 %v258, 0.0
    %v270 = vmin.f32 %v261, 0.0
    %v271 = vmul.f32 %v267, 1.442695
    %v272 = vpow.pop %v271
    %v273 = vmul.f32 %v268, 1.442695
    %v274 = vpow.pop %v273
    %v275 = vmul.f32 %v269, 1.442695
    %v276 = vpow.pop %v275
    %v277 = vmul.f32 %v270, 1.442695
    %v278 = vpow.pop %v277
    %v279 = vsub.f32 %v272, 1.0
    %v280 = vsub.f32 %v274, 1.0
    %v281 = vsub.f32 %v276, 1.0
    %v282 = vsub.f32 %v278, 1.0
    %v283 = vsel %vm263, %v252, %v279
    %v284 = vsel %vm264, %v255, %v280
    %v285 = vsel %vm265, %v258, %v281
    %v286 = vsel %vm266, %v261, %v282
    %v287 = vld [vmem:[%s5] sm:$0xff]
    %v288 = vld [vmem:[%s5 + $0x8] sm:$0xff]
    %v289 = vld [vmem:[%s5 + $0x10] sm:$0xff]
    %v290 = vld [vmem:[%s5 + $0x18] sm:$0xff]
    %v291 = vld [vmem:[%s6] sm:$0xff]
    %v292 = vld [vmem:[%s6 + $0x8] sm:$0xff]
    %v293 = vld [vmem:[%s6 + $0x10] sm:$0xff]
    %v294 = vld [vmem:[%s6 + $0x18] sm:$0xff]
    %296 = vset.pattern.permute.xlu0 0
    %297 = vperm.xlu0 %296, %v291
    %v298 = vpop.permute.xlu0 %297
    %301 = vset.pattern.permute.xlu0 0
    %302 = vperm.xlu0 %301, %v292
    %v303 = vpop.permute.xlu0 %302
    %306 = vset.pattern.permute.xlu0 0
    %307 = vperm.xlu0 %306, %v293
    %v308 = vpop.permute.xlu0 %307
    %311 = vset.pattern.permute.xlu0 0
    %312 = vperm.xlu0 %311, %v294
    %v313 = vpop.permute.xlu0 %312
    %v316 = vsel %vm221, %v287, 0
    %v319 = vsel %vm221, %v288, 0
    %v322 = vsel %vm221, %v289, 0
    %v325 = vsel %vm221, %v290, 0
    %327 = vmatpush.msra.mxu0 0.0
    %328 = vmatpush.msra.mxu0 0.0
    %329 = vmatpush.msra.mxu0 0.0
    %330 = vmatpush.msra.mxu0 0.0
    %331 = vmatpush.msra.mxu0 0.0
    %332 = vmatpush.msra.mxu0 0.0
    %333 = vmatpush.msra.mxu0 0.0
    %334 = vmatpush.msra.mxu0 0.0
    %335 = vmatpush.msra.mxu0 0.0
    %336 = vmatpush.msra.mxu0 0.0
    %337 = vmatpush.msra.mxu0 0.0
    %338 = vmatpush.msra.mxu0 0.0
    %339 = vmatpush.msra.mxu0 %v286
    %340 = vmatpush.msra.mxu0 %v285
    %341 = vmatpush.msra.mxu0 %v284
    %342 = vmatpush.msra.mxu0 %v283
    %343 = vmatmul.f32.gmra.mxu0 %v316
    %v344 = vpop.f32.mrf.mxu0
    %v345 = vadd.f32 %v298, %v344
    %346 = vmatmul.f32.gmra.mxu0 %v319
    %v347 = vpop.f32.mrf.mxu0
    %v348 = vadd.f32 %v303, %v347
    %349 = vmatmul.f32.gmra.mxu0 %v322
    %v350 = vpop.f32.mrf.mxu0
    %v351 = vadd.f32 %v308, %v350
    %352 = vmatmul.f32.gmra.mxu0 %v325
    %v353 = vpop.f32.mrf.mxu0
    %v354 = vadd.f32 %v313, %v353
    %355 = vdwg.mxu0
    %vm356 = vcmp.gt.f32.partialorder %v345, 0.0
    %vm357 = vcmp.gt.f32.partialorder %v348, 0.0
    %vm358 = vcmp.gt.f32.partialorder %v351, 0.0
    %vm359 = vcmp.gt.f32.partialorder %v354, 0.0
    %v360 = vmin.f32 %v345, 0.0
    %v361 = vmin.f32 %v348, 0.0
    %v362 = vmin.f32 %v351, 0.0
    %v363 = vmin.f32 %v354, 0.0
    %v364 = vmul.f32 %v360, 1.442695
    %v365 = vpow.pop %v364
    %v366 = vmul.f32 %v361, 1.442695
    %v367 = vpow.pop %v366
    %v368 = vmul.f32 %v362, 1.442695
    %v369 = vpow.pop %v368
    %v370 = vmul.f32 %v363, 1.442695
    %v371 = vpow.pop %v370
    %v372 = vsub.f32 %v365, 1.0
    %v373 = vsub.f32 %v367, 1.0
    %v374 = vsub.f32 %v369, 1.0
    %v375 = vsub.f32 %v371, 1.0
    %v376 = vsel %vm356, %v345, %v372
    %v377 = vsel %vm357, %v348, %v373
    %v378 = vsel %vm358, %v351, %v374
    %v379 = vsel %vm359, %v354, %v375
    %v380 = vld [vmem:[%s7] sm:$0xff]
    %v381 = vld [vmem:[%s7 + $0x8] sm:$0xff]
    %v382 = vld [vmem:[%s7 + $0x10] sm:$0xff]
    %v383 = vld [vmem:[%s7 + $0x18] sm:$0xff]
    %v384 = vld [vmem:[#allocation2] sm:$0x1]
    %386 = vset.pattern.permute.xlu0 0
    %387 = vperm.xlu0 %386, %v380
    %v388 = vpop.permute.xlu0 %387
    %391 = vset.pattern.permute.xlu0 0
    %392 = vperm.xlu0 %391, %v381
    %v393 = vpop.permute.xlu0 %392
    %396 = vset.pattern.permute.xlu0 0
    %397 = vperm.xlu0 %396, %v382
    %v398 = vpop.permute.xlu0 %397
    %401 = vset.pattern.permute.xlu0 0
    %402 = vperm.xlu0 %401, %v383
    %v403 = vpop.permute.xlu0 %402
    %v405 = vmul.f32 %v376, %v388
    %v406 = vmul.f32 %v377, %v393
    %v407 = vmul.f32 %v378, %v398
    %v408 = vmul.f32 %v379, %v403
    %v409 = vadd.f32 %v405, %v406
    %v410 = vadd.f32 %v409, %v407
    %v411 = vadd.f32 %v410, %v408
    %v412 = vrot.slane %v411, 4
    %v413 = vadd.f32 %v411, %v412
    %v414 = vrot.slane %v413, 2
    %v415 = vadd.f32 %v413, %v414
    %v416 = vrot.slane %v415, 1
    %v417 = vadd.f32 %v415, %v416
    %419 = vset.pattern.permute.xlu0 0
    %420 = vperm.xlu0 %419, %v384
    %v421 = vpop.permute.xlu0 %420
    %v423 = vperm.slane %v421, 0
    %v424 = vadd.f32 %v417, %v423
    %v425 = vxor.u32 %v424, 2147483648
    %v426 = vmul.f32 %v425, 1.442695
    %v427 = vpow.pop %v426
    %v428 = vadd.f32 %v427, 1.0
    %v429 = vrcp.pop %v428
    %v430 = vmul.f32 %v428, %v429
    %v431 = vsub.f32 1.0, %v430
    %v432 = vmul.f32 %v429, %v431
    %v433 = vadd.f32 %v429, %v432
    %vm434 = vweird.f32 %v428
    %vm435 = vweird.f32 %v429
    %vm436 = vmor %vm434, %vm435
    %v437 = vsel %vm436, %v429, %v433
    %v438 = vand.u32 2147483647, %v428
    %vm439 = vcmp.eq.f32.partialorder %v438, 8.507059e+37
    %v440 = vand.u32 %v428, 2147483648
    %v441 = vor.u32 1.1754944e-38, %v440
    %v442 = vsel %vm439, %v441, %v437
    %v443 = vmul.f32 1.0, %v442
    %444 = vst [vmem:[#allocation3] sm:$0x1] %v443
    // Predicated region
    $region38: #{tpu_custom_call.1} parent=1 // pred_check
      _
    $region39: #{tpu_custom_call.1} parent=1 // pred_check_branch
      %446 = sbr.rel (0) target = $region41
    $region40: #{tpu_custom_call.1} parent=1 // pred_region
      %448 = vsyncadd [#allocation4], 0
      %s450 = sshll.u32 [#allocation3], 4
      %s451 = int_to_ptr.vmem [resolvable:$true] %s450
      %s452 = sshll.u32 %s9, 4
      %s453 = int_to_ptr.hbm [resolvable:$true] %s452
      %455 = dma.vmem_to_hbm [thread:$0]  %s451, 16, %s453, [#allocation4]
    $region41: #{tpu_custom_call.1} parent=1 // pred_fallthru
      _
    // Predicated region
    $region42: #{tpu_custom_call.1} parent=1 // pred_check
      _
    $region43: #{tpu_custom_call.1} parent=1 // pred_check_branch
      %457 = sbr.rel (0) target = $region45
    $region44: #{tpu_custom_call.1} parent=1 // pred_region
      %459 = dma.done [#allocation4], 16
    $region45: #{tpu_custom_call.1} parent=1 // pred_fallthru
      _
    %460 = vsyncpa [#allocation4], 1

</llo_original>
